<compile_context>
chip_gen: v6e
topology: v6e:2x2x1
jax: 0.10.0
libtpu: 0.0.40
codegen_flags: <defaults>
</compile_context>

<pallas_src>
import functools

import jax
import jax.numpy as jnp
from jax.experimental import pallas as pl
from jax.experimental.pallas import tpu as pltpu

_HIGHEST = jax.lax.Precision.HIGHEST


def _fused_linear_kernel(x_ref, w_ref, o_ref):
    # x_ref: (TB, 128)  -- each 128-lane row packs two logical 64-feature rows
    # w_ref: (128, 128) -- block_diag(W_fused, W_fused), VMEM-resident
    # o_ref: (TB, 128)
    o_ref[...] = jnp.dot(
        x_ref[...],
        w_ref[...],
        preferred_element_type=jnp.float32,
        precision=_HIGHEST,
    ).astype(o_ref.dtype)


def _round_up(n, m):
    return ((n + m - 1) // m) * m


@functools.partial(jax.jit, static_argnames=("tb",))
def m_forward(x, w1, w_sub, w2, *, tb=4096):
    """Forward pass of module M (linear1 -> sub.linear -> linear2, no biases).

    Args:
      x:     (B, 64)  float32
      w1:    (32, 64) float32  -- torch Linear(64, 32) weight, (out, in)
      w_sub: (32, 32) float32  -- torch Linear(32, 32) weight
      w2:    (64, 32) float32  -- torch Linear(32, 64) weight
      tb:    max packed-row tile size (each packed row = 2 logical rows)
    Returns:
      (B, 64) array in x.dtype
    """
    B = x.shape[0]
    out_dtype = x.dtype
    if B == 0:  # empty-batch guard: never build a (0,)-grid pallas_call
        return jnp.zeros((0, 64), out_dtype)

    # ---- Weight fusion (tiny, fused into the jit program) ------------------
    w_fused = jnp.dot(
        jnp.dot(w1.T, w_sub.T, precision=_HIGHEST), w2.T, precision=_HIGHEST
    )  # (64, 64): x @ w_fused == ((x @ W1^T) @ Wsub^T) @ W2^T
    # Lane-dense trick: block_diag(W_fused, W_fused) applied to rows that pack
    # two logical 64-vectors -> every vreg involved is a full 128 lanes.
    w_block = jnp.kron(jnp.eye(2, dtype=jnp.float32), w_fused.astype(jnp.float32))

    # ---- Tiling: minimal padding, near-even tiles, enough grid steps -------
    b2 = pl.cdiv(B, 2)                         # packed rows needed
    b2_8 = _round_up(b2, 8)                    # only pad to sublane multiple

    if b2_8 >= 2048:
        min_tiles = 4                          # pipeline depth + both v7x TCs
    elif b2_8 >= 128:
        min_tiles = 2                          # give the 2nd v7x TC work
    else:
        min_tiles = 1                          # tiny batch: 1 step, no overhead

    tb_cap = max(8, _round_up(min(tb, b2_8), 8))
    n_tiles = max(pl.cdiv(b2_8, tb_cap), min_tiles)
    tb_eff = _round_up(pl.cdiv(b2_8, n_tiles), 8)   # near-even split, last tile ~full
    n_tiles = pl.cdiv(b2_8, tb_eff)
    b2_pad = n_tiles * tb_eff                  # <= b2_8 + 8*n_tiles packed rows
    rows_pad = 2 * b2_pad

    xf = x.astype(jnp.float32)
    if rows_pad != B:
        xf = jnp.pad(xf, ((0, rows_pad - B), (0, 0)))
    x2 = xf.reshape(b2_pad, 128)               # contiguous: free bitcast view

    out2 = pl.pallas_call(
        _fused_linear_kernel,
        out_shape=jax.ShapeDtypeStruct((b2_pad, 128), jnp.float32),
        grid=(n_tiles,),
        in_specs=[
            pl.BlockSpec((tb_eff, 128), lambda i: (i, 0)),   # x tile (pipelined)
            pl.BlockSpec((128, 128), lambda i: (0, 0)),      # weight, pinned
        ],
        out_specs=pl.BlockSpec((tb_eff, 128), lambda i: (i, 0)),
        compiler_params=pltpu.CompilerParams(
            dimension_semantics=("parallel",),               # v7x: 2 TCs
            vmem_limit_bytes=32 << 20,                       # v5e headroom at tb=4096
        ),
        cost_estimate=pl.CostEstimate(
            flops=2 * b2_pad * 128 * 128,
            transcendentals=0,
            bytes_accessed=(2 * b2_pad * 128 + 128 * 128) * 4,
        ),
    )(x2, w_block)

    out = out2.reshape(rows_pad, 64)
    if rows_pad != B:
        out = out[:B]
    return out.astype(out_dtype)


def _init_linear_weight(key, out_features, in_features):
    # Mimic torch.nn.Linear default init: U(-1/sqrt(in), 1/sqrt(in)).
    bound = 1.0 / jnp.sqrt(jnp.float32(in_features))
    return jax.random.uniform(
        key, (out_features, in_features), dtype=jnp.float32,
        minval=-bound, maxval=bound)


def reference_forward(x, w1, w_sub, w2):
    # Pure-JAX reference (unfused, full f32 precision) matching the torch module.
    h = jnp.dot(x, w1.T, precision=_HIGHEST)
    h = jnp.dot(h, w_sub.T, precision=_HIGHEST)
    return jnp.dot(h, w2.T, precision=_HIGHEST)


if __name__ == "__main__":
    key = jax.random.PRNGKey(0)
    kx, k1, ks, k2, kx2 = jax.random.split(key, 5)

    w1 = _init_linear_weight(k1, 32, 64)      # linear1: Linear(64, 32)
    w_sub = _init_linear_weight(ks, 32, 32)   # sub.linear: Linear(32, 32)
    w2 = _init_linear_weight(k2, 64, 32)      # linear2: Linear(32, 64)

    # Small batch (matches module example_inputs scale).
    batch = 2
    x = jax.random.normal(kx, (batch, 64), dtype=jnp.float32)
    out = jax.block_until_ready(m_forward(x, w1, w_sub, w2))
    ref = reference_forward(x, w1, w_sub, w2)
    assert out.shape == (batch, 64), out.shape
    assert jnp.allclose(out, ref, atol=1e-5, rtol=1e-5), \
        float(jnp.max(jnp.abs(out - ref)))

    # Larger, odd batch: exercises minimal padding + a multi-step parallel grid.
    batch2 = 1027
    xb = jax.random.normal(kx2, (batch2, 64), dtype=jnp.float32)
    outb = jax.block_until_ready(m_forward(xb, w1, w_sub, w2))
    refb = reference_forward(xb, w1, w_sub, w2)
    assert outb.shape == (batch2, 64), outb.shape
    assert jnp.allclose(outb, refb, atol=1e-5, rtol=1e-5), \
        float(jnp.max(jnp.abs(outb - refb)))

    # Empty-batch edge case.
    x0 = jnp.zeros((0, 64), jnp.float32)
    out0 = jax.block_until_ready(m_forward(x0, w1, w_sub, w2))
    assert out0.shape == (0, 64), out0.shape

    print("KERNEL_OK")
</pallas_src>

<mosaic_0001>
module attributes {stable_mosaic.version = 11 : i64} {
  func.func @_fused_linear_kernel(%arg0: i32, %arg1: memref<8x128xf32, #tpu.memory_space<vmem>>, %arg2: memref<128x128xf32, #tpu.memory_space<vmem>>, %arg3: memref<8x128xf32, #tpu.memory_space<vmem>>) attributes {dimension_semantics = [#tpu.dimension_semantics<parallel>], iteration_bounds = array<i64: 1>, scalar_prefetch = 0 : i64, scratch_operands = 0 : i64, tpu.core_type = #tpu.core_type<tc>, window_params = [{transform_indices = @transform_0, window_bounds = array<i64: 8, 128>}, {pipeline_mode = #tpu.pipeline_mode<synchronous>, transform_indices = @transform_1, window_bounds = array<i64: 128, 128>}, {transform_indices = @transform_2, window_bounds = array<i64: 8, 128>}]} {
    %c0 = arith.constant 0 : index
    %c0_0 = arith.constant 0 : index
    %0 = vector.load %arg1[%c0, %c0_0] : memref<8x128xf32, #tpu.memory_space<vmem>>, vector<8x128xf32>
    %c0_1 = arith.constant 0 : index
    %c0_2 = arith.constant 0 : index
    %1 = vector.load %arg2[%c0_1, %c0_2] : memref<128x128xf32, #tpu.memory_space<vmem>>, vector<128x128xf32>
    %cst = arith.constant dense<0.000000e+00> : vector<8x128xf32>
    %2 = tpu.matmul %0, %1, %cst {dimension_numbers = #tpu.dot_dimension_numbers<[1], [0], [0], [1], [0, 0, 1, 1], [], []>, precision = #tpu.contract_precision<fp32>} : vector<8x128xf32>, vector<128x128xf32>, vector<8x128xf32> -> vector<8x128xf32>
    %c0_3 = arith.constant 0 : index
    %c0_4 = arith.constant 0 : index
    %3 = vector.load %arg3[%c0_3, %c0_4] : memref<8x128xf32, #tpu.memory_space<vmem>>, vector<8x128xf32>
    tpu.vector_store %arg3[%c0_3, %c0_4], %2 {strides = array<i32>} : memref<8x128xf32, #tpu.memory_space<vmem>>, vector<8x128xf32>,
    return
  }
  func.func @transform_0(%arg0: i32) -> (i32, i32) {
    %c0_i32 = arith.constant 0 : i32
    %c0_i32_0 = arith.constant 0 : i32
    return %arg0, %c0_i32 : i32, i32
  }
  func.func @transform_1(%arg0: i32) -> (i32, i32) {
    %c0_i32 = arith.constant 0 : i32
    %c0_i32_0 = arith.constant 0 : i32
    %c0_i32_1 = arith.constant 0 : i32
    return %c0_i32, %c0_i32_0 : i32, i32
  }
  func.func @transform_2(%arg0: i32) -> (i32, i32) {
    %c0_i32 = arith.constant 0 : i32
    %c0_i32_0 = arith.constant 0 : i32
    return %arg0, %c0_i32 : i32, i32
  }
}

</mosaic_0001>

<llo_original>
// kernel: m_forward.1
$region0: #{m_forward.1}
  #allocation0 [shape = 'u32[]', space=smem, size = 0x4, offset = 0x4, fixed_abs, tag = 'smem constant byte address 0x4 - core index']
  #allocation1 [shape = 'u32[144,128]{1,0:T(1,128)}', space=vmem, size = 0x12000, scoped, tag = 'internal scratch']
  %s0 = inlined_call_operand.vmem [shape: f32[8,128], index: 0, kind: input, shape index: {}]
  %s1 = inlined_call_operand.vmem [shape: f32[128,128], index: 1, kind: input, shape index: {}]
  %s2 = inlined_call_operand.vmem [shape: f32[8,128], index: 2, kind: output, shape index: {}]
  %s3 = sld [smem:[#allocation0]]
  $region18: #{m_forward.1} parent=0
    _
  %s5 = ssub.s32 1, %s3
  %s6 = scalar_select 0, %s5, %s3
  // Predicated region
  $region2: #{m_forward.1} parent=0 // pred_check
    _
  $region3: #{m_forward.1} parent=0 // pred_check_branch
    %8 = sbr.rel (0) target = $region5
  $region4: #{m_forward.1} parent=0 // pred_region
    _
  $region5: #{m_forward.1} parent=0 // pred_fallthru
    _
  // Predicated region
  $region6: #{m_forward.1} parent=0 // pred_check
    _
  $region7: #{m_forward.1} parent=0 // pred_check_branch
    %10 = sbr.rel (0) target = $region9
  $region8: #{m_forward.1} parent=0 // pred_region
    _
  $region9: #{m_forward.1} parent=0 // pred_fallthru
    _
  %v11 = vld [vmem:[%s0] sm:$0xff]
  %v12 = vld [vmem:[%s1] sm:$0xff]
  %v13 = vld [vmem:[%s1 + $0x8] sm:$0xff]
  %v14 = vld [vmem:[%s1 + $0x10] sm:$0xff]
  %v15 = vld [vmem:[%s1 + $0x18] sm:$0xff]
  %v16 = vld [vmem:[%s1 + $0x20] sm:$0xff]
  %v17 = vld [vmem:[%s1 + $0x28] sm:$0xff]
  %v18 = vld [vmem:[%s1 + $0x30] sm:$0xff]
  %v19 = vld [vmem:[%s1 + $0x38] sm:$0xff]
  %v20 = vld [vmem:[%s1 + $0x40] sm:$0xff]
  %v21 = vld [vmem:[%s1 + $0x48] sm:$0xff]
  %v22 = vld [vmem:[%s1 + $0x50] sm:$0xff]
  %v23 = vld [vmem:[%s1 + $0x58] sm:$0xff]
  %v24 = vld [vmem:[%s1 + $0x60] sm:$0xff]
  %v25 = vld [vmem:[%s1 + $0x68] sm:$0xff]
  %v26 = vld [vmem:[%s1 + $0x70] sm:$0xff]
  %v27 = vld [vmem:[%s1 + $0x78] sm:$0xff]
  %28 = vmatprep.subr.mxu0 0.0
  %v29 = vand.u32 %v27, 4294901760
  %30 = vmatpush1.msra.mxu0 %v29
  %31 = vmatprep.subr.mxu0 0.0
  %v32 = vand.u32 %v26, 4294901760
  %33 = vmatpush1.msra.mxu0 %v32
  %34 = vmatprep.subr.mxu0 0.0
  %v35 = vand.u32 %v25, 4294901760
  %36 = vmatpush1.msra.mxu0 %v35
  %37 = vmatprep.subr.mxu0 0.0
  %v38 = vand.u32 %v24, 4294901760
  %39 = vmatpush1.msra.mxu0 %v38
  %40 = vmatprep.subr.mxu0 0.0
  %v41 = vand.u32 %v23, 4294901760
  %42 = vmatpush1.msra.mxu0 %v41
  %43 = vmatprep.subr.mxu0 0.0
  %v44 = vand.u32 %v22, 4294901760
  %45 = vmatpush1.msra.mxu0 %v44
  %46 = vmatprep.subr.mxu0 0.0
  %v47 = vand.u32 %v21, 4294901760
  %48 = vmatpush1.msra.mxu0 %v47
  %49 = vmatprep.subr.mxu0 0.0
  %v50 = vand.u32 %v20, 4294901760
  %51 = vmatpush1.msra.mxu0 %v50
  %52 = vmatprep.subr.mxu0 0.0
  %v53 = vand.u32 %v19, 4294901760
  %54 = vmatpush1.msra.mxu0 %v53
  %55 = vmatprep.subr.mxu0 0.0
  %v56 = vand.u32 %v18, 4294901760
  %57 = vmatpush1.msra.mxu0 %v56
  %58 = vmatprep.subr.mxu0 0.0
  %v59 = vand.u32 %v17, 4294901760
  %60 = vmatpush1.msra.mxu0 %v59
  %61 = vmatprep.subr.mxu0 0.0
  %v62 = vand.u32 %v16, 4294901760
  %63 = vmatpush1.msra.mxu0 %v62
  %64 = vmatprep.subr.mxu0 0.0
  %v65 = vand.u32 %v15, 4294901760
  %66 = vmatpush1.msra.mxu0 %v65
  %67 = vmatprep.subr.mxu0 0.0
  %v68 = vand.u32 %v14, 4294901760
  %69 = vmatpush1.msra.mxu0 %v68
  %70 = vmatprep.subr.mxu0 0.0
  %v71 = vand.u32 %v13, 4294901760
  %72 = vmatpush1.msra.mxu0 %v71
  %73 = vmatprep.subr.mxu0 0.0
  %v74 = vand.u32 %v12, 4294901760
  %75 = vmatpush1.msra.mxu0 %v74
  %76 = vmatprep.subr.mxu0 0.0
  %77 = vmatpush2.msra.mxu0 0.0
  %78 = vmatprep.subr.mxu0 0.0
  %79 = vmatpush2.msra.mxu0 0.0
  %80 = vmatprep.subr.mxu0 0.0
  %81 = vmatpush2.msra.mxu0 0.0
  %82 = vmatprep.subr.mxu0 0.0
  %83 = vmatpush2.msra.mxu0 0.0
  %84 = vmatprep.subr.mxu0 0.0
  %85 = vmatpush2.msra.mxu0 0.0
  %86 = vmatprep.subr.mxu0 0.0
  %87 = vmatpush2.msra.mxu0 0.0
  %88 = vmatprep.subr.mxu0 0.0
  %89 = vmatpush2.msra.mxu0 0.0
  %90 = vmatprep.subr.mxu0 0.0
  %91 = vmatpush2.msra.mxu0 0.0
  %92 = vmatprep.subr.mxu0 0.0
  %93 = vmatpush2.msra.mxu0 0.0
  %94 = vmatprep.subr.mxu0 0.0
  %95 = vmatpush2.msra.mxu0 0.0
  %96 = vmatprep.subr.mxu0 0.0
  %97 = vmatpush2.msra.mxu0 0.0
  %98 = vmatprep.subr.mxu0 0.0
  %99 = vmatpush2.msra.mxu0 0.0
  %100 = vmatprep.subr.mxu0 0.0
  %101 = vmatpush2.msra.mxu0 0.0
  %102 = vmatprep.subr.mxu0 0.0
  %103 = vmatpush2.msra.mxu0 0.0
  %104 = vmatprep.subr.mxu0 0.0
  %105 = vmatpush2.msra.mxu0 0.0
  %106 = vmatprep.subr.mxu0 0.0
  %107 = vmatpush2.msra.mxu0 0.0
  %108 = vmatprep.mubr.f32.mxu0 0.0
  %v109 = vand.u32 %v11, 4294901760
  %v110 = vsub.f32 %v11, %v109
  %v111 = vand.u32 %v110, 4294901760
  %v112 = vsub.f32 %v110, %v111
  %v113 = vand.u32 %v112, 4294901760
  %114 = vmatmul.mubr.f32.gmra.mxu0 %v113
  %v115 = vpop.f32.mrf.mxu0
  %v116 = vadd.f32 0.0, %v115
  %v117 = vpop.f32.mrf.mxu0
  %118 = vdwg.mxu0
  %119 = vmatprep.subr.mxu0 0.0
  %v120 = vand.u32 %v27, 4294901760
  %v121 = vsub.f32 %v27, %v120
  %v122 = vand.u32 %v121, 4294901760
  %v123 = vsub.f32 %v121, %v122
  %v124 = vand.u32 %v123, 4294901760
  %125 = vmatpush1.msra.mxu0 %v124
  %126 = vmatprep.subr.mxu0 0.0
  %v127 = vand.u32 %v26, 4294901760
  %v128 = vsub.f32 %v26, %v127
  %v129 = vand.u32 %v128, 4294901760
  %v130 = vsub.f32 %v128, %v129
  %v131 = vand.u32 %v130, 4294901760
  %132 = vmatpush1.msra.mxu0 %v131
  %133 = vmatprep.subr.mxu0 0.0
  %v134 = vand.u32 %v25, 4294901760
  %v135 = vsub.f32 %v25, %v134
  %v136 = vand.u32 %v135, 4294901760
  %v137 = vsub.f32 %v135, %v136
  %v138 = vand.u32 %v137, 4294901760
  %139 = vmatpush1.msra.mxu0 %v138
  %140 = vmatprep.subr.mxu0 0.0
  %v141 = vand.u32 %v24, 4294901760
  %v142 = vsub.f32 %v24, %v141
  %v143 = vand.u32 %v142, 4294901760
  %v144 = vsub.f32 %v142, %v143
  %v145 = vand.u32 %v144, 4294901760
  %146 = vmatpush1.msra.mxu0 %v145
  %147 = vmatprep.subr.mxu0 0.0
  %v148 = vand.u32 %v23, 4294901760
  %v149 = vsub.f32 %v23, %v148
  %v150 = vand.u32 %v149, 4294901760
  %v151 = vsub.f32 %v149, %v150
  %v152 = vand.u32 %v151, 4294901760
  %153 = vmatpush1.msra.mxu0 %v152
  %154 = vmatprep.subr.mxu0 0.0
  %v155 = vand.u32 %v22, 4294901760
  %v156 = vsub.f32 %v22, %v155
  %v157 = vand.u32 %v156, 4294901760
  %v158 = vsub.f32 %v156, %v157
  %v159 = vand.u32 %v158, 4294901760
  %160 = vmatpush1.msra.mxu0 %v159
  %161 = vmatprep.subr.mxu0 0.0
  %v162 = vand.u32 %v21, 4294901760
  %v163 = vsub.f32 %v21, %v162
  %v164 = vand.u32 %v163, 4294901760
  %v165 = vsub.f32 %v163, %v164
  %v166 = vand.u32 %v165, 4294901760
  %167 = vmatpush1.msra.mxu0 %v166
  %168 = vmatprep.subr.mxu0 0.0
  %v169 = vand.u32 %v20, 4294901760
  %v170 = vsub.f32 %v20, %v169
  %v171 = vand.u32 %v170, 4294901760
  %v172 = vsub.f32 %v170, %v171
  %v173 = vand.u32 %v172, 4294901760
  %174 = vmatpush1.msra.mxu0 %v173
  %175 = vmatprep.subr.mxu0 0.0
  %v176 = vand.u32 %v19, 4294901760
  %v177 = vsub.f32 %v19, %v176
  %v178 = vand.u32 %v177, 4294901760
  %v179 = vsub.f32 %v177, %v178
  %v180 = vand.u32 %v179, 4294901760
  %181 = vmatpush1.msra.mxu0 %v180
  %182 = vmatprep.subr.mxu0 0.0
  %v183 = vand.u32 %v18, 4294901760
  %v184 = vsub.f32 %v18, %v183
  %v185 = vand.u32 %v184, 4294901760
  %v186 = vsub.f32 %v184, %v185
  %v187 = vand.u32 %v186, 4294901760
  %188 = vmatpush1.msra.mxu0 %v187
  %189 = vmatprep.subr.mxu0 0.0
  %v190 = vand.u32 %v17, 4294901760
  %v191 = vsub.f32 %v17, %v190
  %v192 = vand.u32 %v191, 4294901760
  %v193 = vsub.f32 %v191, %v192
  %v194 = vand.u32 %v193, 4294901760
  %195 = vmatpush1.msra.mxu0 %v194
  %196 = vmatprep.subr.mxu0 0.0
  %v197 = vand.u32 %v16, 4294901760
  %v198 = vsub.f32 %v16, %v197
  %v199 = vand.u32 %v198, 4294901760
  %v200 = vsub.f32 %v198, %v199
  %v201 = vand.u32 %v200, 4294901760
  %202 = vmatpush1.msra.mxu0 %v201
  %203 = vmatprep.subr.mxu0 0.0
  %v204 = vand.u32 %v15, 4294901760
  %v205 = vsub.f32 %v15, %v204
  %v206 = vand.u32 %v205, 4294901760
  %v207 = vsub.f32 %v205, %v206
  %v208 = vand.u32 %v207, 4294901760
  %209 = vmatpush1.msra.mxu0 %v208
  %210 = vmatprep.subr.mxu0 0.0
  %v211 = vand.u32 %v14, 4294901760
  %v212 = vsub.f32 %v14, %v211
  %v213 = vand.u32 %v212, 4294901760
  %v214 = vsub.f32 %v212, %v213
  %v215 = vand.u32 %v214, 4294901760
  %216 = vmatpush1.msra.mxu0 %v215
  %217 = vmatprep.subr.mxu0 0.0
  %v218 = vand.u32 %v13, 4294901760
  %v219 = vsub.f32 %v13, %v218
  %v220 = vand.u32 %v219, 4294901760
  %v221 = vsub.f32 %v219, %v220
  %v222 = vand.u32 %v221, 4294901760
  %223 = vmatpush1.msra.mxu0 %v222
  %224 = vmatprep.subr.mxu0 0.0
  %v225 = vand.u32 %v12, 4294901760
  %v226 = vsub.f32 %v12, %v225
  %v227 = vand.u32 %v226, 4294901760
  %v228 = vsub.f32 %v226, %v227
  %v229 = vand.u32 %v228, 4294901760
  %230 = vmatpush1.msra.mxu0 %v229
  %231 = vmatprep.subr.mxu0 0.0
  %232 = vmatpush2.msra.mxu0 0.0
  %233 = vmatprep.subr.mxu0 0.0
  %234 = vmatpush2.msra.mxu0 0.0
  %235 = vmatprep.subr.mxu0 0.0
  %236 = vmatpush2.msra.mxu0 0.0
  %237 = vmatprep.subr.mxu0 0.0
  %238 = vmatpush2.msra.mxu0 0.0
  %239 = vmatprep.subr.mxu0 0.0
  %240 = vmatpush2.msra.mxu0 0.0
  %241 = vmatprep.subr.mxu0 0.0
  %242 = vmatpush2.msra.mxu0 0.0
  %243 = vmatprep.subr.mxu0 0.0
  %244 = vmatpush2.msra.mxu0 0.0
  %245 = vmatprep.subr.mxu0 0.0
  %246 = vmatpush2.msra.mxu0 0.0
  %247 = vmatprep.subr.mxu0 0.0
  %248 = vmatpush2.msra.mxu0 0.0
  %249 = vmatprep.subr.mxu0 0.0
  %250 = vmatpush2.msra.mxu0 0.0
  %251 = vmatprep.subr.mxu0 0.0
  %252 = vmatpush2.msra.mxu0 0.0
  %253 = vmatprep.subr.mxu0 0.0
  %254 = vmatpush2.msra.mxu0 0.0
  %255 = vmatprep.subr.mxu0 0.0
  %256 = vmatpush2.msra.mxu0 0.0
  %257 = vmatprep.subr.mxu0 0.0
  %258 = vmatpush2.msra.mxu0 0.0
  %259 = vmatprep.subr.mxu0 0.0
  %260 = vmatpush2.msra.mxu0 0.0
  %261 = vmatprep.subr.mxu0 0.0
  %262 = vmatpush2.msra.mxu0 0.0
  %263 = vmatprep.mubr.f32.mxu0 0.0
  %v264 = vand.u32 %v11, 4294901760
  %265 = vmatmul.mubr.f32.gmra.mxu0 %v264
  %v266 = vpop.f32.mrf.mxu0
  %v267 = vadd.f32 %v116, %v266
  %v268 = vpop.f32.mrf.mxu0
  %269 = vdwg.mxu0
  %270 = vmatprep.subr.mxu0 0.0
  %v271 = vand.u32 %v27, 4294901760
  %v272 = vsub.f32 %v27, %v271
  %273 = vmatpush1.msra.mxu0 %v272
  %274 = vmatprep.subr.mxu0 0.0
  %v275 = vand.u32 %v26, 4294901760
  %v276 = vsub.f32 %v26, %v275
  %277 = vmatpush1.msra.mxu0 %v276
  %278 = vmatprep.subr.mxu0 0.0
  %v279 = vand.u32 %v25, 4294901760
  %v280 = vsub.f32 %v25, %v279
  %281 = vmatpush1.msra.mxu0 %v280
  %282 = vmatprep.subr.mxu0 0.0
  %v283 = vand.u32 %v24, 4294901760
  %v284 = vsub.f32 %v24, %v283
  %285 = vmatpush1.msra.mxu0 %v284
  %286 = vmatprep.subr.mxu0 0.0
  %v287 = vand.u32 %v23, 4294901760
  %v288 = vsub.f32 %v23, %v287
  %289 = vmatpush1.msra.mxu0 %v288
  %290 = vmatprep.subr.mxu0 0.0
  %v291 = vand.u32 %v22, 4294901760
  %v292 = vsub.f32 %v22, %v291
  %293 = vmatpush1.msra.mxu0 %v292
  %294 = vmatprep.subr.mxu0 0.0
  %v295 = vand.u32 %v21, 4294901760
  %v296 = vsub.f32 %v21, %v295
  %297 = vmatpush1.msra.mxu0 %v296
  %298 = vmatprep.subr.mxu0 0.0
  %v299 = vand.u32 %v20, 4294901760
  %v300 = vsub.f32 %v20, %v299
  %301 = vmatpush1.msra.mxu0 %v300
  %302 = vmatprep.subr.mxu0 0.0
  %v303 = vand.u32 %v19, 4294901760
  %v304 = vsub.f32 %v19, %v303
  %305 = vmatpush1.msra.mxu0 %v304
  %306 = vmatprep.subr.mxu0 0.0
  %v307 = vand.u32 %v18, 4294901760
  %v308 = vsub.f32 %v18, %v307
  %309 = vmatpush1.msra.mxu0 %v308
  %310 = vmatprep.subr.mxu0 0.0
  %v311 = vand.u32 %v17, 4294901760
  %v312 = vsub.f32 %v17, %v311
  %313 = vmatpush1.msra.mxu0 %v312
  %314 = vmatprep.subr.mxu0 0.0
  %v315 = vand.u32 %v16, 4294901760
  %v316 = vsub.f32 %v16, %v315
  %317 = vmatpush1.msra.mxu0 %v316
  %318 = vmatprep.subr.mxu0 0.0
  %v319 = vand.u32 %v15, 4294901760
  %v320 = vsub.f32 %v15, %v319
  %321 = vmatpush1.msra.mxu0 %v320
  %322 = vmatprep.subr.mxu0 0.0
  %v323 = vand.u32 %v14, 4294901760
  %v324 = vsub.f32 %v14, %v323
  %325 = vmatpush1.msra.mxu0 %v324
  %326 = vmatprep.subr.mxu0 0.0
  %v327 = vand.u32 %v13, 4294901760
  %v328 = vsub.f32 %v13, %v327
  %329 = vmatpush1.msra.mxu0 %v328
  %330 = vmatprep.subr.mxu0 0.0
  %v331 = vand.u32 %v12, 4294901760
  %v332 = vsub.f32 %v12, %v331
  %333 = vmatpush1.msra.mxu0 %v332
  %334 = vmatprep.subr.mxu0 0.0
  %335 = vmatpush2.msra.mxu0 0.0
  %336 = vmatprep.subr.mxu0 0.0
  %337 = vmatpush2.msra.mxu0 0.0
  %338 = vmatprep.subr.mxu0 0.0
  %339 = vmatpush2.msra.mxu0 0.0
  %340 = vmatprep.subr.mxu0 0.0
  %341 = vmatpush2.msra.mxu0 0.0
  %342 = vmatprep.subr.mxu0 0.0
  %343 = vmatpush2.msra.mxu0 0.0
  %344 = vmatprep.subr.mxu0 0.0
  %345 = vmatpush2.msra.mxu0 0.0
  %346 = vmatprep.subr.mxu0 0.0
  %347 = vmatpush2.msra.mxu0 0.0
  %348 = vmatprep.subr.mxu0 0.0
  %349 = vmatpush2.msra.mxu0 0.0
  %350 = vmatprep.subr.mxu0 0.0
  %351 = vmatpush2.msra.mxu0 0.0
  %352 = vmatprep.subr.mxu0 0.0
  %353 = vmatpush2.msra.mxu0 0.0
  %354 = vmatprep.subr.mxu0 0.0
  %355 = vmatpush2.msra.mxu0 0.0
  %356 = vmatprep.subr.mxu0 0.0
  %357 = vmatpush2.msra.mxu0 0.0
  %358 = vmatprep.subr.mxu0 0.0
  %359 = vmatpush2.msra.mxu0 0.0
  %360 = vmatprep.subr.mxu0 0.0
  %361 = vmatpush2.msra.mxu0 0.0
  %362 = vmatprep.subr.mxu0 0.0
  %363 = vmatpush2.msra.mxu0 0.0
  %364 = vmatprep.subr.mxu0 0.0
  %365 = vmatpush2.msra.mxu0 0.0
  %366 = vmatprep.mubr.f32.mxu0 0.0
  %v367 = vand.u32 %v11, 4294901760
  %v368 = vsub.f32 %v11, %v367
  %369 = vmatmul.mubr.f32.gmra.mxu0 %v368
  %v370 = vpop.f32.mrf.mxu0
  %v371 = vadd.f32 %v267, %v370
  %v372 = vpop.f32.mrf.mxu0
  %373 = vdwg.mxu0
  %374 = vmatprep.subr.mxu0 0.0
  %v375 = vand.u32 %v27, 4294901760
  %376 = vmatpush1.msra.mxu0 %v375
  %377 = vmatprep.subr.mxu0 0.0
  %v378 = vand.u32 %v26, 4294901760
  %379 = vmatpush1.msra.mxu0 %v378
  %380 = vmatprep.subr.mxu0 0.0
  %v381 = vand.u32 %v25, 4294901760
  %382 = vmatpush1.msra.mxu0 %v381
  %383 = vmatprep.subr.mxu0 0.0
  %v384 = vand.u32 %v24, 4294901760
  %385 = vmatpush1.msra.mxu0 %v384
  %386 = vmatprep.subr.mxu0 0.0
  %v387 = vand.u32 %v23, 4294901760
  %388 = vmatpush1.msra.mxu0 %v387
  %389 = vmatprep.subr.mxu0 0.0
  %v390 = vand.u32 %v22, 4294901760
  %391 = vmatpush1.msra.mxu0 %v390
  %392 = vmatprep.subr.mxu0 0.0
  %v393 = vand.u32 %v21, 4294901760
  %394 = vmatpush1.msra.mxu0 %v393
  %395 = vmatprep.subr.mxu0 0.0
  %v396 = vand.u32 %v20, 4294901760
  %397 = vmatpush1.msra.mxu0 %v396
  %398 = vmatprep.subr.mxu0 0.0
  %v399 = vand.u32 %v19, 4294901760
  %400 = vmatpush1.msra.mxu0 %v399
  %401 = vmatprep.subr.mxu0 0.0
  %v402 = vand.u32 %v18, 4294901760
  %403 = vmatpush1.msra.mxu0 %v402
  %404 = vmatprep.subr.mxu0 0.0
  %v405 = vand.u32 %v17, 4294901760
  %406 = vmatpush1.msra.mxu0 %v405
  %407 = vmatprep.subr.mxu0 0.0
  %v408 = vand.u32 %v16, 4294901760
  %409 = vmatpush1.msra.mxu0 %v408
  %410 = vmatprep.subr.mxu0 0.0
  %v411 = vand.u32 %v15, 4294901760
  %412 = vmatpush1.msra.mxu0 %v411
  %413 = vmatprep.subr.mxu0 0.0
  %v414 = vand.u32 %v14, 4294901760
  %415 = vmatpush1.msra.mxu0 %v414
  %416 = vmatprep.subr.mxu0 0.0
  %v417 = vand.u32 %v13, 4294901760
  %418 = vmatpush1.msra.mxu0 %v417
  %419 = vmatprep.subr.mxu0 0.0
  %v420 = vand.u32 %v12, 4294901760
  %421 = vmatpush1.msra.mxu0 %v420
  %422 = vmatprep.subr.mxu0 0.0
  %423 = vmatpush2.msra.mxu0 0.0
  %424 = vmatprep.subr.mxu0 0.0
  %425 = vmatpush2.msra.mxu0 0.0
  %426 = vmatprep.subr.mxu0 0.0
  %427 = vmatpush2.msra.mxu0 0.0
  %428 = vmatprep.subr.mxu0 0.0
  %429 = vmatpush2.msra.mxu0 0.0
  %430 = vmatprep.subr.mxu0 0.0
  %431 = vmatpush2.msra.mxu0 0.0
  %432 = vmatprep.subr.mxu0 0.0
  %433 = vmatpush2.msra.mxu0 0.0
  %434 = vmatprep.subr.mxu0 0.0
  %435 = vmatpush2.msra.mxu0 0.0
  %436 = vmatprep.subr.mxu0 0.0
  %437 = vmatpush2.msra.mxu0 0.0
  %438 = vmatprep.subr.mxu0 0.0
  %439 = vmatpush2.msra.mxu0 0.0
  %440 = vmatprep.subr.mxu0 0.0
  %441 = vmatpush2.msra.mxu0 0.0
  %442 = vmatprep.subr.mxu0 0.0
  %443 = vmatpush2.msra.mxu0 0.0
  %444 = vmatprep.subr.mxu0 0.0
  %445 = vmatpush2.msra.mxu0 0.0
  %446 = vmatprep.subr.mxu0 0.0
  %447 = vmatpush2.msra.mxu0 0.0
  %448 = vmatprep.subr.mxu0 0.0
  %449 = vmatpush2.msra.mxu0 0.0
  %450 = vmatprep.subr.mxu0 0.0
  %451 = vmatpush2.msra.mxu0 0.0
  %452 = vmatprep.subr.mxu0 0.0
  %453 = vmatpush2.msra.mxu0 0.0
  %454 = vmatprep.mubr.f32.mxu0 0.0
  %v455 = vand.u32 %v11, 4294901760
  %v456 = vsub.f32 %v11, %v455
  %v457 = vand.u32 %v456, 4294901760
  %458 = vmatmul.mubr.f32.gmra.mxu0 %v457
  %v459 = vpop.f32.mrf.mxu0
  %v460 = vadd.f32 %v371, %v459
  %v461 = vpop.f32.mrf.mxu0
  %462 = vdwg.mxu0
  %463 = vmatprep.subr.mxu0 0.0
  %v464 = vand.u32 %v27, 4294901760
  %v465 = vsub.f32 %v27, %v464
  %v466 = vand.u32 %v465, 4294901760
  %467 = vmatpush1.msra.mxu0 %v466
  %468 = vmatprep.subr.mxu0 0.0
  %v469 = vand.u32 %v26, 4294901760
  %v470 = vsub.f32 %v26, %v469
  %v471 = vand.u32 %v470, 4294901760
  %472 = vmatpush1.msra.mxu0 %v471
  %473 = vmatprep.subr.mxu0 0.0
  %v474 = vand.u32 %v25, 4294901760
  %v475 = vsub.f32 %v25, %v474
  %v476 = vand.u32 %v475, 4294901760
  %477 = vmatpush1.msra.mxu0 %v476
  %478 = vmatprep.subr.mxu0 0.0
  %v479 = vand.u32 %v24, 4294901760
  %v480 = vsub.f32 %v24, %v479
  %v481 = vand.u32 %v480, 4294901760
  %482 = vmatpush1.msra.mxu0 %v481
  %483 = vmatprep.subr.mxu0 0.0
  %v484 = vand.u32 %v23, 4294901760
  %v485 = vsub.f32 %v23, %v484
  %v486 = vand.u32 %v485, 4294901760
  %487 = vmatpush1.msra.mxu0 %v486
  %488 = vmatprep.subr.mxu0 0.0
  %v489 = vand.u32 %v22, 4294901760
  %v490 = vsub.f32 %v22, %v489
  %v491 = vand.u32 %v490, 4294901760
  %492 = vmatpush1.msra.mxu0 %v491
  %493 = vmatprep.subr.mxu0 0.0
  %v494 = vand.u32 %v21, 4294901760
  %v495 = vsub.f32 %v21, %v494
  %v496 = vand.u32 %v495, 4294901760
  %497 = vmatpush1.msra.mxu0 %v496
  %498 = vmatprep.subr.mxu0 0.0
  %v499 = vand.u32 %v20, 4294901760
  %v500 = vsub.f32 %v20, %v499
  %v501 = vand.u32 %v500, 4294901760
  %502 = vmatpush1.msra.mxu0 %v501
  %503 = vmatprep.subr.mxu0 0.0
  %v504 = vand.u32 %v19, 4294901760
  %v505 = vsub.f32 %v19, %v504
  %v506 = vand.u32 %v505, 4294901760
  %507 = vmatpush1.msra.mxu0 %v506
  %508 = vmatprep.subr.mxu0 0.0
  %v509 = vand.u32 %v18, 4294901760
  %v510 = vsub.f32 %v18, %v509
  %v511 = vand.u32 %v510, 4294901760
  %512 = vmatpush1.msra.mxu0 %v511
  %513 = vmatprep.subr.mxu0 0.0
  %v514 = vand.u32 %v17, 4294901760
  %v515 = vsub.f32 %v17, %v514
  %v516 = vand.u32 %v515, 4294901760
  %517 = vmatpush1.msra.mxu0 %v516
  %518 = vmatprep.subr.mxu0 0.0
  %v519 = vand.u32 %v16, 4294901760
  %v520 = vsub.f32 %v16, %v519
  %v521 = vand.u32 %v520, 4294901760
  %522 = vmatpush1.msra.mxu0 %v521
  %523 = vmatprep.subr.mxu0 0.0
  %v524 = vand.u32 %v15, 4294901760
  %v525 = vsub.f32 %v15, %v524
  %v526 = vand.u32 %v525, 4294901760
  %527 = vmatpush1.msra.mxu0 %v526
  %528 = vmatprep.subr.mxu0 0.0
  %v529 = vand.u32 %v14, 4294901760
  %v530 = vsub.f32 %v14, %v529
  %v531 = vand.u32 %v530, 4294901760
  %532 = vmatpush1.msra.mxu0 %v531
  %533 = vmatprep.subr.mxu0 0.0
  %v534 = vand.u32 %v13, 4294901760
  %v535 = vsub.f32 %v13, %v534
  %v536 = vand.u32 %v535, 4294901760
  %537 = vmatpush1.msra.mxu0 %v536
  %538 = vmatprep.subr.mxu0 0.0
  %v539 = vand.u32 %v12, 4294901760
  %v540 = vsub.f32 %v12, %v539
  %v541 = vand.u32 %v540, 4294901760
  %542 = vmatpush1.msra.mxu0 %v541
  %543 = vmatprep.subr.mxu0 0.0
  %544 = vmatpush2.msra.mxu0 0.0
  %545 = vmatprep.subr.mxu0 0.0
  %546 = vmatpush2.msra.mxu0 0.0
  %547 = vmatprep.subr.mxu0 0.0
  %548 = vmatpush2.msra.mxu0 0.0
  %549 = vmatprep.subr.mxu0 0.0
  %550 = vmatpush2.msra.mxu0 0.0
  %551 = vmatprep.subr.mxu0 0.0
  %552 = vmatpush2.msra.mxu0 0.0
  %553 = vmatprep.subr.mxu0 0.0
  %554 = vmatpush2.msra.mxu0 0.0
  %555 = vmatprep.subr.mxu0 0.0
  %556 = vmatpush2.msra.mxu0 0.0
  %557 = vmatprep.subr.mxu0 0.0
  %558 = vmatpush2.msra.mxu0 0.0
  %559 = vmatprep.subr.mxu0 0.0
  %560 = vmatpush2.msra.mxu0 0.0
  %561 = vmatprep.subr.mxu0 0.0
  %562 = vmatpush2.msra.mxu0 0.0
  %563 = vmatprep.subr.mxu0 0.0
  %564 = vmatpush2.msra.mxu0 0.0
  %565 = vmatprep.subr.mxu0 0.0
  %566 = vmatpush2.msra.mxu0 0.0
  %567 = vmatprep.subr.mxu0 0.0
  %568 = vmatpush2.msra.mxu0 0.0
  %569 = vmatprep.subr.mxu0 0.0
  %570 = vmatpush2.msra.mxu0 0.0
  %571 = vmatprep.subr.mxu0 0.0
  %572 = vmatpush2.msra.mxu0 0.0
  %573 = vmatprep.subr.mxu0 0.0
  %574 = vmatpush2.msra.mxu0 0.0
  %575 = vmatprep.mubr.f32.mxu0 0.0
  %v576 = vand.u32 %v11, 4294901760
  %577 = vmatmul.mubr.f32.gmra.mxu0 %v576
  %v578 = vpop.f32.mrf.mxu0
  %v579 = vadd.f32 %v460, %v578
  %v580 = vpop.f32.mrf.mxu0
  %581 = vdwg.mxu0
  %582 = vmatprep.subr.mxu0 0.0
  %v583 = vand.u32 %v27, 4294901760
  %584 = vmatpush1.msra.mxu0 %v583
  %585 = vmatprep.subr.mxu0 0.0
  %v586 = vand.u32 %v26, 4294901760
  %587 = vmatpush1.msra.mxu0 %v586
  %588 = vmatprep.subr.mxu0 0.0
  %v589 = vand.u32 %v25, 4294901760
  %590 = vmatpush1.msra.mxu0 %v589
  %591 = vmatprep.subr.mxu0 0.0
  %v592 = vand.u32 %v24, 4294901760
  %593 = vmatpush1.msra.mxu0 %v592
  %594 = vmatprep.subr.mxu0 0.0
  %v595 = vand.u32 %v23, 4294901760
  %596 = vmatpush1.msra.mxu0 %v595
  %597 = vmatprep.subr.mxu0 0.0
  %v598 = vand.u32 %v22, 4294901760
  %599 = vmatpush1.msra.mxu0 %v598
  %600 = vmatprep.subr.mxu0 0.0
  %v601 = vand.u32 %v21, 4294901760
  %602 = vmatpush1.msra.mxu0 %v601
  %603 = vmatprep.subr.mxu0 0.0
  %v604 = vand.u32 %v20, 4294901760
  %605 = vmatpush1.msra.mxu0 %v604
  %606 = vmatprep.subr.mxu0 0.0
  %v607 = vand.u32 %v19, 4294901760
  %608 = vmatpush1.msra.mxu0 %v607
  %609 = vmatprep.subr.mxu0 0.0
  %v610 = vand.u32 %v18, 4294901760
  %611 = vmatpush1.msra.mxu0 %v610
  %612 = vmatprep.subr.mxu0 0.0
  %v613 = vand.u32 %v17, 4294901760
  %614 = vmatpush1.msra.mxu0 %v613
  %615 = vmatprep.subr.mxu0 0.0
  %v616 = vand.u32 %v16, 4294901760
  %617 = vmatpush1.msra.mxu0 %v616
  %618 = vmatprep.subr.mxu0 0.0
  %v619 = vand.u32 %v15, 4294901760
  %620 = vmatpush1.msra.mxu0 %v619
  %621 = vmatprep.subr.mxu0 0.0
  %v622 = vand.u32 %v14, 4294901760
  %623 = vmatpush1.msra.mxu0 %v622
  %624 = vmatprep.subr.mxu0 0.0
  %v625 = vand.u32 %v13, 4294901760
  %626 = vmatpush1.msra.mxu0 %v625
  %627 = vmatprep.subr.mxu0 0.0
  %v628 = vand.u32 %v12, 4294901760
  %629 = vmatpush1.msra.mxu0 %v628
  %630 = vmatprep.subr.mxu0 0.0
  %631 = vmatpush2.msra.mxu0 0.0
  %632 = vmatprep.subr.mxu0 0.0
  %633 = vmatpush2.msra.mxu0 0.0
  %634 = vmatprep.subr.mxu0 0.0
  %635 = vmatpush2.msra.mxu0 0.0
  %636 = vmatprep.subr.mxu0 0.0
  %637 = vmatpush2.msra.mxu0 0.0
  %638 = vmatprep.subr.mxu0 0.0
  %639 = vmatpush2.msra.mxu0 0.0
  %640 = vmatprep.subr.mxu0 0.0
  %641 = vmatpush2.msra.mxu0 0.0
  %642 = vmatprep.subr.mxu0 0.0
  %643 = vmatpush2.msra.mxu0 0.0
  %644 = vmatprep.subr.mxu0 0.0
  %645 = vmatpush2.msra.mxu0 0.0
  %646 = vmatprep.subr.mxu0 0.0
  %647 = vmatpush2.msra.mxu0 0.0
  %648 = vmatprep.subr.mxu0 0.0
  %649 = vmatpush2.msra.mxu0 0.0
  %650 = vmatprep.subr.mxu0 0.0
  %651 = vmatpush2.msra.mxu0 0.0
  %652 = vmatprep.subr.mxu0 0.0
  %653 = vmatpush2.msra.mxu0 0.0
  %654 = vmatprep.subr.mxu0 0.0
  %655 = vmatpush2.msra.mxu0 0.0
  %656 = vmatprep.subr.mxu0 0.0
  %657 = vmatpush2.msra.mxu0 0.0
  %658 = vmatprep.subr.mxu0 0.0
  %659 = vmatpush2.msra.mxu0 0.0
  %660 = vmatprep.subr.mxu0 0.0
  %661 = vmatpush2.msra.mxu0 0.0
  %662 = vmatprep.mubr.f32.mxu0 0.0
  %v663 = vand.u32 %v11, 4294901760
  %664 = vmatmul.mubr.f32.gmra.mxu0 %v663
  %v665 = vpop.f32.mrf.mxu0
  %v666 = vadd.f32 %v579, %v665
  %v667 = vpop.f32.mrf.mxu0
  %668 = vdwg.mxu0
  %669 = vst [vmem:[%s2] sm:$0xff] %v666
  // Predicated region
  $region10: #{m_forward.1} parent=0 // pred_check
    _
  $region11: #{m_forward.1} parent=0 // pred_check_branch
    %671 = sbr.rel (0) target = $region13
  $region12: #{m_forward.1} parent=0 // pred_region
    _
  $region13: #{m_forward.1} parent=0 // pred_fallthru
    _
  // Predicated region
  $region14: #{m_forward.1} parent=0 // pred_check
    _
  $region15: #{m_forward.1} parent=0 // pred_check_branch
    %673 = sbr.rel (0) target = $region17
  $region16: #{m_forward.1} parent=0 // pred_region
    _
  $region17: #{m_forward.1} parent=0 // pred_fallthru
    _

</llo_original>
